<compile_context>
chip_gen: v7x
topology: tpu7x:2x2x1
jax: 0.10.0
libtpu: 0.0.40
codegen_flags: <defaults>
</compile_context>

<pallas_src>
import jax
import jax.numpy as jnp
from jax.experimental import pallas as pl
from jax.experimental.pallas import tpu as pltpu

_MASK_VALUE = -1e30  # finite => no NaN rows even if a mask row is fully set


def _vmem_capacity_bytes():
    """Physical VMEM of the current chip; conservative 64 MiB fallback."""
    try:
        return int(pltpu.get_tpu_info().vmem_capacity_bytes)
    except Exception:
        return 64 * 1024 * 1024


def _choose_q_tile(L, max_tile):
    """Largest query tile dividing L: prefer 128-multiples (MXU-friendly),
    then 8-multiples (sublane alignment); fall back to full L."""
    if L <= max_tile:
        return L
    for step in (128, 8):
        t = (max_tile // step) * step
        while t >= step:
            if L % t == 0:
                return t
            t -= step
    return L


def _make_kernel(inv_temp, eps, compute_dtype, causal, return_attn):
    compute_dtype = jnp.dtype(compute_dtype)
    approx_recip = compute_dtype != jnp.dtype(jnp.float32)

    def kernel(*refs):
        it = iter(refs)
        q_ref = next(it)
        k_ref = next(it)
        v_ref = next(it)
        mask_ref = None if causal else next(it)
        gamma_ref = next(it)
        beta_ref = next(it)
        out_ref = next(it)
        attn_ref = next(it) if return_attn else None

        tq = q_ref.shape[1]
        L = k_ref.shape[1]
        row0 = pl.multiple_of(pl.program_id(1) * tq, tq)

        # Pre-scale q by 1/sqrt(D): L*D multiplies instead of L*L on scores.
        q = q_ref[0].astype(compute_dtype) * inv_temp
        k = k_ref[0].astype(compute_dtype)
        v = v_ref[0].astype(compute_dtype)

        # scores = q @ k^T without materializing k.T (contract feature dims).
        scores = jax.lax.dot_general(
            q, k,
            dimension_numbers=(((1,), (1,)), ((), ())),
            preferred_element_type=jnp.float32)

        if causal:
            # Build the causal mask in-kernel: no (B,L,L) HBM mask stream.
            rows = row0 + jax.lax.broadcasted_iota(jnp.int32, (tq, L), 0)
            cols = jax.lax.broadcasted_iota(jnp.int32, (tq, L), 1)
            scores = jnp.where(cols > rows, _MASK_VALUE, scores)
        else:
            scores = jnp.where(mask_ref[0] != 0, _MASK_VALUE, scores)

        # softmax over keys (matches nn.Softmax(dim=2)).
        # exp / normalization in compute_dtype (bf16 EUP on v6e/v7x fast
        # path); row-sum and reciprocal stay in f32 for stability.
        smax = jnp.max(scores, axis=-1, keepdims=True)
        e = jnp.exp((scores - smax).astype(compute_dtype))
        denom = jnp.sum(e, axis=-1, keepdims=True, dtype=jnp.float32)
        recip = pl.reciprocal(denom, approx=approx_recip)
        attn_c = e * recip.astype(compute_dtype)   # cast once, reused below

        if return_attn:
            attn_ref[0] = attn_c.astype(attn_ref.dtype)

        # output = attn @ v  (f32 accumulation on the MXU)
        out = jnp.dot(attn_c, v, preferred_element_type=jnp.float32)

        # residual = the v rows of this query tile, then LayerNorm over D.
        resid = v_ref[0, pl.ds(row0, tq), :].astype(jnp.float32)
        x = out + resid
        mean = jnp.mean(x, axis=-1, keepdims=True)
        xc = x - mean
        var = jnp.mean(xc * xc, axis=-1, keepdims=True)
        xn = xc * jax.lax.rsqrt(var + eps)
        out_ref[0] = (xn * gamma_ref[0].astype(jnp.float32)
                      + beta_ref[0].astype(jnp.float32)).astype(out_ref.dtype)

    return kernel


def self_attention(q, k, v, mask, gamma, beta, *, eps=1e-5,
                   compute_dtype=jnp.bfloat16, attn_dtype=None,
                   causal=False, return_attn=True, max_q_tile=None):
    """q,k,v: (B, L, D); mask: (B, L, L) nonzero == masked (or None with
    causal=True); gamma,beta: (D,). Returns (output, attn) when
    return_attn=True, else just output."""
    B, L, D = q.shape
    assert k.shape == (B, L, D) and v.shape == (B, L, D)
    compute_dtype = jnp.dtype(compute_dtype)
    if attn_dtype is None:
        # bf16 attn halves the dominant HBM write on the fast path.
        attn_dtype = (jnp.dtype(jnp.float32)
                      if compute_dtype == jnp.dtype(jnp.float32)
                      else jnp.dtype(jnp.bfloat16))
    else:
        attn_dtype = jnp.dtype(attn_dtype)
    out_dtype = jnp.dtype(q.dtype)
    inv_temp = 1.0 / (float(D) ** 0.5)

    # Fast path: cast q/k/v once in the wrapper -> half the HBM read traffic
    # and half the resident (L,D) k/v VMEM blocks.
    if jnp.dtype(q.dtype) != compute_dtype:
        q = q.astype(compute_dtype)
        k = k.astype(compute_dtype)
        v = v.astype(compute_dtype)

    if not causal:
        assert mask is not None and mask.shape == (B, L, L)
        if mask.dtype != jnp.int8:          # shrink the mask HBM stream
            mask = (mask != 0).astype(jnp.int8)

    gamma2 = gamma.reshape(1, D).astype(jnp.float32)
    beta2 = beta.reshape(1, D).astype(jnp.float32)

    # Generation-aware tiling / VMEM budget.
    vmem_cap = _vmem_capacity_bytes()
    if max_q_tile is None:
        max_q_tile = 512 if vmem_cap >= 100 * 1024 * 1024 else 256
    tq = _choose_q_tile(L, max_q_tile)
    nq = L // tq

    kernel = _make_kernel(inv_temp, eps, compute_dtype, causal, return_attn)

    qkv_isz = jnp.dtype(q.dtype).itemsize
    blk_bytes = (tq * D * qkv_isz            # q tile
                 + 2 * L * D * qkv_isz       # k, v (full)
                 + tq * D * out_dtype.itemsize
                 + 2 * D * 4)                # gamma, beta
    if not causal:
        blk_bytes += tq * L                  # int8 mask tile
    if return_attn:
        blk_bytes += tq * L * attn_dtype.itemsize
    # f32 scores + compute_dtype e/attn temporaries + f32 out/resid rows.
    temp_bytes = tq * L * (4 + 2 * compute_dtype.itemsize) + 2 * tq * D * 4
    need = 2 * blk_bytes + temp_bytes + (4 << 20)
    vmem_limit = int(min(max(need, 32 << 20), int(vmem_cap * 0.85)))

    in_specs = [
        pl.BlockSpec((1, tq, D), lambda b, i: (b, i, 0)),   # q tile
        pl.BlockSpec((1, L, D), lambda b, i: (b, 0, 0)),    # k (full)
        pl.BlockSpec((1, L, D), lambda b, i: (b, 0, 0)),    # v (full)
    ]
    inputs = [q, k, v]
    if not causal:
        in_specs.append(pl.BlockSpec((1, tq, L), lambda b, i: (b, i, 0)))
        inputs.append(mask)
    in_specs += [
        pl.BlockSpec((1, D), lambda b, i: (0, 0)),          # gamma
        pl.BlockSpec((1, D), lambda b, i: (0, 0)),          # beta
    ]
    inputs += [gamma2, beta2]

    out_spec_o = pl.BlockSpec((1, tq, D), lambda b, i: (b, i, 0))
    if return_attn:
        out_shapes = (jax.ShapeDtypeStruct((B, L, D), out_dtype),
                      jax.ShapeDtypeStruct((B, L, L), attn_dtype))
        out_specs = [out_spec_o,
                     pl.BlockSpec((1, tq, L), lambda b, i: (b, i, 0))]
    else:
        out_shapes = jax.ShapeDtypeStruct((B, L, D), out_dtype)
        out_specs = out_spec_o

    grid_spec = pltpu.PrefetchScalarGridSpec(
        num_scalar_prefetch=0,
        grid=(B, nq),
        in_specs=in_specs,
        out_specs=out_specs,
    )

    return pl.pallas_call(
        kernel,
        out_shape=out_shapes,
        grid_spec=grid_spec,
        compiler_params=pltpu.CompilerParams(
            dimension_semantics=("parallel", "parallel"),
            vmem_limit_bytes=vmem_limit),
    )(*inputs)


def _reference(q, k, v, mask, gamma, beta, eps=1e-5):
    D = q.shape[-1]
    scores = jnp.einsum("bld,bmd->blm", q, k) / (float(D) ** 0.5)
    scores = jnp.where(mask != 0, -jnp.inf, scores)
    attn = jax.nn.softmax(scores, axis=-1)
    out = jnp.einsum("blm,bmd->bld", attn, v)
    x = out + v
    mean = jnp.mean(x, axis=-1, keepdims=True)
    var = jnp.mean((x - mean) ** 2, axis=-1, keepdims=True)
    xn = (x - mean) / jnp.sqrt(var + eps)
    return xn * gamma + beta, attn


if __name__ == "__main__":
    B, L, D = 2, 8, 32
    key = jax.random.PRNGKey(0)
    kq, kk, kv = jax.random.split(key, 3)
    q = jax.random.normal(kq, (B, L, D), dtype=jnp.float32)
    k = jax.random.normal(kk, (B, L, D), dtype=jnp.float32)
    v = jax.random.normal(kv, (B, L, D), dtype=jnp.float32)

    # causal mask (1 => masked-out strictly-future position)
    causal_mask = (jnp.arange(L)[:, None] < jnp.arange(L)[None, :]).astype(jnp.int8)
    mask = jnp.broadcast_to(causal_mask, (B, L, L))

    # nn.LayerNorm(emb_dim) deterministic init: weight=1, bias=0
    gamma = jnp.ones((D,), dtype=jnp.float32)
    beta = jnp.zeros((D,), dtype=jnp.float32)

    ref_out, ref_attn = _reference(q, k, v, mask, gamma, beta)

    # Exact path: f32 compute + exact reciprocal, explicit mask stream —
    # faithful to the torch module.
    out32, attn32 = self_attention(q, k, v, mask, gamma, beta,
                                   compute_dtype=jnp.float32)
    out32, attn32 = jax.block_until_ready((out32, attn32))
    assert jnp.allclose(out32, ref_out, atol=1e-3, rtol=1e-3)
    assert jnp.allclose(attn32, ref_attn, atol=1e-3, rtol=1e-3)

    # Fast path (default): bf16 MXU/EUP, f32 accumulation, in-kernel causal
    # mask (no (B,L,L) mask HBM stream), bf16 attn output. Loose tolerance is
    # the expected bf16 rounding, not a kernel bug.
    outbf, attnbf = self_attention(q, k, v, None, gamma, beta, causal=True)
    outbf, attnbf = jax.block_until_ready((outbf, attnbf))
    assert jnp.allclose(attnbf.astype(jnp.float32), ref_attn, atol=8e-2, rtol=8e-2)
    assert jnp.allclose(outbf.astype(jnp.float32), ref_out, atol=2e-1, rtol=2e-1)

    # Fastest path: skip materializing attn entirely (dominant HBM stream).
    out_only = self_attention(q, k, v, None, gamma, beta,
                              causal=True, return_attn=False)
    out_only = jax.block_until_ready(out_only)
    assert jnp.allclose(out_only.astype(jnp.float32), ref_out, atol=2e-1, rtol=2e-1)

    print("KERNEL_OK")
</pallas_src>

<mosaic_0001>
module attributes {stable_mosaic.version = 11 : i64} {
  func.func @kernel(%arg0: i32, %arg1: i32, %arg2: memref<1x8x32xf32, #tpu.memory_space<vmem>>, %arg3: memref<1x8x32xf32, #tpu.memory_space<vmem>>, %arg4: memref<1x8x32xf32, #tpu.memory_space<vmem>>, %arg5: memref<1x8x8xi8, #tpu.memory_space<vmem>>, %arg6: memref<1x32xf32, #tpu.memory_space<vmem>>, %arg7: memref<1x32xf32, #tpu.memory_space<vmem>>, %arg8: memref<1x8x32xf32, #tpu.memory_space<vmem>>, %arg9: memref<1x8x8xf32, #tpu.memory_space<vmem>>) attributes {dimension_semantics = [#tpu.dimension_semantics<parallel>, #tpu.dimension_semantics<parallel>], iteration_bounds = array<i64: 2, 1>, scalar_prefetch = 0 : i64, scratch_operands = 0 : i64, tpu.core_type = #tpu.core_type<tc>, window_params = [{transform_indices = @transform_0, window_bounds = array<i64: 1, 8, 32>}, {transform_indices = @transform_1, window_bounds = array<i64: 1, 8, 32>}, {transform_indices = @transform_2, window_bounds = array<i64: 1, 8, 32>}, {transform_indices = @transform_3, window_bounds = array<i64: 1, 8, 8>}, {pipeline_mode = #tpu.pipeline_mode<synchronous>, transform_indices = @transform_4, window_bounds = array<i64: 1, 32>}, {pipeline_mode = #tpu.pipeline_mode<synchronous>, transform_indices = @transform_5, window_bounds = array<i64: 1, 32>}, {transform_indices = @transform_6, window_bounds = array<i64: 1, 8, 32>}, {transform_indices = @transform_7, window_bounds = array<i64: 1, 8, 8>}]} {
    %c8_i32 = arith.constant 8 : i32
    %0 = arith.muli %arg1, %c8_i32 : i32
    %1 = tpu.assume_multiple %0, 8 : i32
    %c0 = arith.constant 0 : index
    %c0_0 = arith.constant 0 : index
    %c0_1 = arith.constant 0 : index
    %2 = vector.load %arg2[%c0, %c0_0, %c0_1] : memref<1x8x32xf32, #tpu.memory_space<vmem>>, vector<1x8x32xf32>
    %3 = vector.shape_cast %2 : vector<1x8x32xf32> to vector<8x32xf32>
    %cst = arith.constant 0.176776692 : f32
    %4 = vector.broadcast %cst : f32 to vector<8x32xf32>
    %5 = arith.mulf %3, %4 : vector<8x32xf32>
    %c0_2 = arith.constant 0 : index
    %c0_3 = arith.constant 0 : index
    %c0_4 = arith.constant 0 : index
    %6 = vector.load %arg3[%c0_2, %c0_3, %c0_4] : memref<1x8x32xf32, #tpu.memory_space<vmem>>, vector<1x8x32xf32>
    %7 = vector.shape_cast %6 : vector<1x8x32xf32> to vector<8x32xf32>
    %c0_5 = arith.constant 0 : index
    %c0_6 = arith.constant 0 : index
    %c0_7 = arith.constant 0 : index
    %8 = vector.load %arg4[%c0_5, %c0_6, %c0_7] : memref<1x8x32xf32, #tpu.memory_space<vmem>>, vector<1x8x32xf32>
    %9 = vector.shape_cast %8 : vector<1x8x32xf32> to vector<8x32xf32>
    %cst_8 = arith.constant dense<0.000000e+00> : vector<8x8xf32>
    %10 = tpu.matmul %5, %7, %cst_8 {dimension_numbers = #tpu.dot_dimension_numbers<[1], [1], [0], [0], [0, 0, 1, 0], [], []>} : vector<8x32xf32>, vector<8x32xf32>, vector<8x8xf32> -> vector<8x8xf32>
    %c0_9 = arith.constant 0 : index
    %c0_10 = arith.constant 0 : index
    %c0_11 = arith.constant 0 : index
    %11 = vector.load %arg5[%c0_9, %c0_10, %c0_11] : memref<1x8x8xi8, #tpu.memory_space<vmem>>, vector<1x8x8xi8>
    %12 = vector.shape_cast %11 : vector<1x8x8xi8> to vector<8x8xi8>
    %c0_i8 = arith.constant 0 : i8
    %13 = vector.broadcast %c0_i8 : i8 to vector<8x8xi8>
    %14 = arith.cmpi ne, %12, %13 : vector<8x8xi8>
    %cst_12 = arith.constant -1.000000e+30 : f32
    %15 = vector.broadcast %cst_12 : f32 to vector<8x8xf32>
    %16 = arith.select %14, %15, %10 : vector<8x8xi1>, vector<8x8xf32>
    %cst_13 = arith.constant dense<0xFF800000> : vector<8xf32>
    %17 = vector.multi_reduction <maximumf>, %16, %cst_13 [1] : vector<8x8xf32> to vector<8xf32>
    %18 = vector.shape_cast %17 : vector<8xf32> to vector<8x1xf32>
    %19 = vector.broadcast %18 : vector<8x1xf32> to vector<8x8xf32>
    %20 = arith.subf %16, %19 : vector<8x8xf32>
    %21 = math.exp %20 : vector<8x8xf32>
    %cst_14 = arith.constant dense<0.000000e+00> : vector<8xf32>
    %22 = vector.multi_reduction <add>, %21, %cst_14 [1] : vector<8x8xf32> to vector<8xf32>
    %23 = vector.shape_cast %22 : vector<8xf32> to vector<8x1xf32>
    %24 = tpu.reciprocal %23 : vector<8x1xf32> -> vector<8x1xf32>
    %25 = vector.broadcast %24 : vector<8x1xf32> to vector<8x8xf32>
    %26 = arith.mulf %21, %25 : vector<8x8xf32>
    %c0_15 = arith.constant 0 : index
    %c0_16 = arith.constant 0 : index
    %c0_17 = arith.constant 0 : index
    %27 = vector.load %arg9[%c0_15, %c0_16, %c0_17] : memref<1x8x8xf32, #tpu.memory_space<vmem>>, vector<1x8x8xf32>
    %28 = vector.shape_cast %27 : vector<1x8x8xf32> to vector<8x8xf32>
    %29 = vector.shape_cast %26 : vector<8x8xf32> to vector<1x8x8xf32>
    tpu.vector_store %arg9[%c0_15, %c0_16, %c0_17], %29 {strides = array<i32>} : memref<1x8x8xf32, #tpu.memory_space<vmem>>, vector<1x8x8xf32>,
    %cst_18 = arith.constant dense<0.000000e+00> : vector<8x32xf32>
    %30 = tpu.matmul %26, %9, %cst_18 {dimension_numbers = #tpu.dot_dimension_numbers<[1], [0], [0], [1], [0, 0, 1, 1], [], []>} : vector<8x8xf32>, vector<8x32xf32>, vector<8x32xf32> -> vector<8x32xf32>
    %c0_19 = arith.constant 0 : index
    %31 = arith.index_cast %1 : i32 to index
    %c0_20 = arith.constant 0 : index
    %32 = vector.load %arg4[%c0_19, %31, %c0_20] : memref<1x8x32xf32, #tpu.memory_space<vmem>>, vector<1x8x32xf32>
    %33 = vector.shape_cast %32 : vector<1x8x32xf32> to vector<8x32xf32>
    %34 = arith.addf %30, %33 : vector<8x32xf32>
    %cst_21 = arith.constant dense<0.000000e+00> : vector<8xf32>
    %35 = vector.multi_reduction <add>, %34, %cst_21 [1] : vector<8x32xf32> to vector<8xf32>
    %36 = vector.shape_cast %35 : vector<8xf32> to vector<8x1xf32>
    %cst_22 = arith.constant 3.200000e+01 : f32
    %37 = vector.broadcast %cst_22 : f32 to vector<8x1xf32>
    %38 = arith.divf %36, %37 : vector<8x1xf32>
    %39 = vector.broadcast %38 : vector<8x1xf32> to vector<8x32xf32>
    %40 = arith.subf %34, %39 : vector<8x32xf32>
    %41 = arith.mulf %40, %40 : vector<8x32xf32>
    %cst_23 = arith.constant dense<0.000000e+00> : vector<8xf32>
    %42 = vector.multi_reduction <add>, %41, %cst_23 [1] : vector<8x32xf32> to vector<8xf32>
    %43 = vector.shape_cast %42 : vector<8xf32> to vector<8x1xf32>
    %cst_24 = arith.constant 3.200000e+01 : f32
    %44 = vector.broadcast %cst_24 : f32 to vector<8x1xf32>
    %45 = arith.divf %43, %44 : vector<8x1xf32>
    %cst_25 = arith.constant 9.99999974E-6 : f32
    %46 = vector.broadcast %cst_25 : f32 to vector<8x1xf32>
    %47 = arith.addf %45, %46 : vector<8x1xf32>
    %48 = math.rsqrt %47 : vector<8x1xf32>
    %49 = vector.broadcast %48 : vector<8x1xf32> to vector<8x32xf32>
    %50 = arith.mulf %40, %49 : vector<8x32xf32>
    %c0_26 = arith.constant 0 : index
    %c0_27 = arith.constant 0 : index
    %51 = vector.load %arg6[%c0_26, %c0_27] : memref<1x32xf32, #tpu.memory_space<vmem>>, vector<1x32xf32>
    %52 = vector.shape_cast %51 : vector<1x32xf32> to vector<32xf32>
    %53 = vector.shape_cast %52 : vector<32xf32> to vector<1x32xf32>
    %54 = vector.broadcast %53 : vector<1x32xf32> to vector<8x32xf32>
    %55 = arith.mulf %50, %54 : vector<8x32xf32>
    %c0_28 = arith.constant 0 : index
    %c0_29 = arith.constant 0 : index
    %56 = vector.load %arg7[%c0_28, %c0_29] : memref<1x32xf32, #tpu.memory_space<vmem>>, vector<1x32xf32>
    %57 = vector.shape_cast %56 : vector<1x32xf32> to vector<32xf32>
    %58 = vector.shape_cast %57 : vector<32xf32> to vector<1x32xf32>
    %59 = vector.broadcast %58 : vector<1x32xf32> to vector<8x32xf32>
    %60 = arith.addf %55, %59 : vector<8x32xf32>
    %c0_30 = arith.constant 0 : index
    %c0_31 = arith.constant 0 : index
    %c0_32 = arith.constant 0 : index
    %61 = vector.load %arg8[%c0_30, %c0_31, %c0_32] : memref<1x8x32xf32, #tpu.memory_space<vmem>>, vector<1x8x32xf32>
    %62 = vector.shape_cast %61 : vector<1x8x32xf32> to vector<8x32xf32>
    %63 = vector.shape_cast %60 : vector<8x32xf32> to vector<1x8x32xf32>
    tpu.vector_store %arg8[%c0_30, %c0_31, %c0_32], %63 {strides = array<i32>} : memref<1x8x32xf32, #tpu.memory_space<vmem>>, vector<1x8x32xf32>,
    return
  }
  func.func @transform_0(%arg0: i32, %arg1: i32) -> (i32, i32, i32) {
    %c0_i32 = arith.constant 0 : i32
    %c0_i32_0 = arith.constant 0 : i32
    return %arg0, %arg1, %c0_i32 : i32, i32, i32
  }
  func.func @transform_1(%arg0: i32, %arg1: i32) -> (i32, i32, i32) {
    %c0_i32 = arith.constant 0 : i32
    %c0_i32_0 = arith.constant 0 : i32
    %c0_i32_1 = arith.constant 0 : i32
    return %arg0, %c0_i32, %c0_i32_0 : i32, i32, i32
  }
  func.func @transform_2(%arg0: i32, %arg1: i32) -> (i32, i32, i32) {
    %c0_i32 = arith.constant 0 : i32
    %c0_i32_0 = arith.constant 0 : i32
    %c0_i32_1 = arith.constant 0 : i32
    return %arg0, %c0_i32, %c0_i32_0 : i32, i32, i32
  }
  func.func @transform_3(%arg0: i32, %arg1: i32) -> (i32, i32, i32) {
    %c0_i32 = arith.constant 0 : i32
    %c0_i32_0 = arith.constant 0 : i32
    return %arg0, %arg1, %c0_i32 : i32, i32, i32
  }
  func.func @transform_4(%arg0: i32, %arg1: i32) -> (i32, i32) {
    %c0_i32 = arith.constant 0 : i32
    %c0_i32_0 = arith.constant 0 : i32
    %c0_i32_1 = arith.constant 0 : i32
    return %c0_i32, %c0_i32_0 : i32, i32
  }
  func.func @transform_5(%arg0: i32, %arg1: i32) -> (i32, i32) {
    %c0_i32 = arith.constant 0 : i32
    %c0_i32_0 = arith.constant 0 : i32
    %c0_i32_1 = arith.constant 0 : i32
    return %c0_i32, %c0_i32_0 : i32, i32
  }
  func.func @transform_6(%arg0: i32, %arg1: i32) -> (i32, i32, i32) {
    %c0_i32 = arith.constant 0 : i32
    %c0_i32_0 = arith.constant 0 : i32
    return %arg0, %arg1, %c0_i32 : i32, i32, i32
  }
  func.func @transform_7(%arg0: i32, %arg1: i32) -> (i32, i32, i32) {
    %c0_i32 = arith.constant 0 : i32
    %c0_i32_0 = arith.constant 0 : i32
    return %arg0, %arg1, %c0_i32 : i32, i32, i32
  }
}

</mosaic_0001>

<llo_original>
// kernel: tpu_custom_call.1
$region0: #{tpu_custom_call.1}
  #allocation0 [shape = 'u32[]', space=smem, size = 0x4, offset = 0x4, fixed_abs, tag = 'smem constant byte address 0x4 - core index']
  #allocation1 [shape = 'u32[144,128]{1,0:T(1,128)}', space=vmem, size = 0x12000, scoped, tag = 'internal scratch']
  %s0 = inlined_call_operand.hbm [shape: f32[2,8,32], index: 0, kind: input, shape index: {}]
  %s1 = inlined_call_operand.hbm [shape: f32[2,8,32], index: 1, kind: input, shape index: {}]
  %s2 = inlined_call_operand.hbm [shape: f32[2,8,32], index: 2, kind: input, shape index: {}]
  %s3 = inlined_call_operand.vmem [shape: s8[2,8,8], index: 3, kind: input, shape index: {}]
  %s4 = inlined_call_operand.vmem [shape: f32[1,32], index: 4, kind: input, shape index: {}]
  %s5 = inlined_call_operand.vmem [shape: f32[1,32], index: 5, kind: input, shape index: {}]
  %s6 = inlined_call_operand.hbm [shape: f32[2,8,32], index: 6, kind: output, shape index: {0}]
  %s7 = inlined_call_operand.hbm [shape: f32[2,8,8], index: 7, kind: output, shape index: {1}]
  %8 = xla_tuple %s6, %s7
  %s9 = sld [smem:[#allocation0]]
  $region77: #{tpu_custom_call.1} parent=0
    _
  %s11 = ssub.s32 1, %s9
  %s12 = scalar_select 0, %s11, %s9
  $region1: #{tpu_custom_call.1} parent=0
    #allocation2 [shape = 'u8[8192]{0}', space=vmem, size = 0x2000, scoped, tag = 'input window, operand 0']
    #allocation3 [shape = 's32[2]{0}', space=sflag, size = 0x8, scoped, tag = 'scoped memory for tpu_custom_call.1']
    #allocation4 [shape = 's32[2]{0}', space=sflag, size = 0x8, scoped, tag = 'scoped memory for tpu_custom_call.1']
    #allocation5 [shape = 'u8[8192]{0}', space=vmem, size = 0x2000, scoped, tag = 'input window, operand 1']
    #allocation6 [shape = 's32[2]{0}', space=sflag, size = 0x8, scoped, tag = 'scoped memory for tpu_custom_call.1']
    #allocation7 [shape = 'u8[8192]{0}', space=vmem, size = 0x2000, scoped, tag = 'input window, operand 2']
    #allocation8 [shape = 'u8[8192]{0}', space=vmem, size = 0x2000, scoped, tag = 'output window, operand 0']
    #allocation9 [shape = 'u8[8192]{0}', space=vmem, size = 0x2000, scoped, tag = 'output window, operand 1']
    #allocation10 [shape = 's32[2]{0}', space=sflag, size = 0x8, scoped, tag = 'scoped memory for tpu_custom_call.1']
    %13 = vsyncpa [#allocation3], 0
    %s14 = scalar_lea.sflag [#allocation3], 1
    %15 = vsyncpa %s14, 0
    %16 = vsyncpa [#allocation6], 0
    %s17 = scalar_lea.sflag [#allocation6], 1
    %18 = vsyncpa %s17, 0
    %19 = vsyncpa [#allocation4], 0
    %s20 = scalar_lea.sflag [#allocation4], 1
    %21 = vsyncpa %s20, 0
    %22 = vsyncpa [#allocation10], 0
    %s23 = scalar_lea.sflag [#allocation10], 1
    %24 = vsyncpa %s23, 0
    loop: start=0, step=1, limit=4
    $region2: #{tpu_custom_call.1} parent=1 // loop_pre_header
      _
    $region3: #{tpu_custom_call.1} parent=1 // loop_header
      %s26 = sphi 0, %s30
      %p27 = scmp.ge.s32.totalorder %s26, 4
      %s33 = sphi 0, %s45
      %s34 = sphi 0, %s41
      %s35 = sphi 0, %s33
      %s36 = sphi 0, %s34
      %s37 = sphi 0, %s35
      %s38 = sphi 0, %s36
      %s50 = sphi 0, %s52
      %s53 = sphi 0, %s50
      %s54 = sphi 0, %s53
      %s70 = sphi 0, %s54
      %s76 = sphi 0, %s78
      %s79 = sphi 0, %s76
      %s80 = sphi 0, %s79
      %s96 = sphi 0, %s80
      %s102 = sphi 0, %s104
      %s105 = sphi 0, %s102
      %s106 = sphi 0, %s105
      %s122 = sphi 0, %s106
      %s130 = sphi 0, %s132
      %s133 = sphi 0, %s130
      %s134 = sphi 0, %s133
      %s150 = sphi 0, %s134
      %s154 = sphi 0, %s154
      %s156 = sphi 0, %s154
      %s157 = sphi 0, %s156
      %s171 = sphi 0, %s157
      %s175 = sphi 0, %s175
      %s177 = sphi 0, %s175
      %s178 = sphi 0, %s177
      %s192 = sphi 0, %s178
      %s200 = sphi 0, %s202
      %s203 = sphi 0, %s200
      %s204 = sphi 0, %s203
      %s220 = sphi 0, %s204
      %s228 = sphi 0, %s230
      %s231 = sphi 0, %s228
      %s232 = sphi 0, %s231
      %s248 = sphi 0, %s232
    $region4: #{tpu_custom_call.1} parent=1 // loop_header_branch
      %29 = sbr.rel (%p27) target = $region8
    $region5: #{tpu_custom_call.1} parent=1 // loop_body
      %s31 = ssub.s32 %s26, 1
      %s32 = ssub.s32 %s26, 2
      %s39 = sadd.s32 1, %s34
      %p40 = scmp.ge.s32.totalorder %s39, 1
      %s41 = scalar_select %p40, 0, %s39
      %s42 = sadd.s32 1, %s33
      %s43 = scalar_select %p40, %s42, %s33
      %p44 = scmp.ge.s32.totalorder %s43, 2
      %s45 = scalar_select %p44, 0, %s43
      %s46 = ssub.s32 %s33, %s45
      %s47 = ssub.s32 %s34, %s41
      %s48 = sor.u32 %s46, %s47
      %p49 = scmp.eq.s32.totalorder %s48, 0
      %s51 = sadd.s32 %s50, 1
      %s52 = scalar_select %p49, %s50, %s51
      %p55 = pneg %p49
      %p56 = scmp.eq.s32.totalorder %s26, 1
      %p57 = por %p55, %p56
      %p58 = scmp.ne.s32.totalorder %s50, %s53
      %p59 = scmp.eq.s32.totalorder %s26, 0
      %p60 = por %p58, %p59
      %p61 = scmp.ne.s32.totalorder %s50, %s53
      %p62 = scmp.eq.s32.totalorder %s31, 1
      %p63 = por %p61, %p62
      %p64 = scmp.ne.s32.totalorder %s53, %s54
      %p65 = scmp.eq.s32.totalorder %s31, 0
      %p66 = por %p64, %p65
      %p67 = scmp.ne.s32.totalorder %s53, %s54
      %p68 = scmp.eq.s32.totalorder %s32, 1
      %p69 = por %p67, %p68
      %p71 = scmp.ne.s32.totalorder %s54, %s70
      %p72 = scmp.eq.s32.totalorder %s32, 0
      %p73 = por %p71, %p72
      %s74 = ssub.s32 %s33, %s45
      %p75 = scmp.eq.s32.totalorder %s74, 0
      %s77 = sadd.s32 %s76, 1
      %s78 = scalar_select %p75, %s76, %s77
      %p81 = pneg %p75
      %p82 = scmp.eq.s32.totalorder %s26, 1
      %p83 = por %p81, %p82
      %p84 = scmp.ne.s32.totalorder %s76, %s79
      %p85 = scmp.eq.s32.totalorder %s26, 0
      %p86 = por %p84, %p85
      %p87 = scmp.ne.s32.totalorder %s76, %s79
      %p88 = scmp.eq.s32.totalorder %s31, 1
      %p89 = por %p87, %p88
      %p90 = scmp.ne.s32.totalorder %s79, %s80
      %p91 = scmp.eq.s32.totalorder %s31, 0
      %p92 = por %p90, %p91
      %p93 = scmp.ne.s32.totalorder %s79, %s80
      %p94 = scmp.eq.s32.totalorder %s32, 1
      %p95 = por %p93, %p94
      %p97 = scmp.ne.s32.totalorder %s80, %s96
      %p98 = scmp.eq.s32.totalorder %s32, 0
      %p99 = por %p97, %p98
      %s100 = ssub.s32 %s33, %s45
      %p101 = scmp.eq.s32.totalorder %s100, 0
      %s103 = sadd.s32 %s102, 1
      %s104 = scalar_select %p101, %s102, %s103
      %p107 = pneg %p101
      %p108 = scmp.eq.s32.totalorder %s26, 1
      %p109 = por %p107, %p108
      %p110 = scmp.ne.s32.totalorder %s102, %s105
      %p111 = scmp.eq.s32.totalorder %s26, 0
      %p112 = por %p110, %p111
      %p113 = scmp.ne.s32.totalorder %s102, %s105
      %p114 = scmp.eq.s32.totalorder %s31, 1
      %p115 = por %p113, %p114
      %p116 = scmp.ne.s32.totalorder %s105, %s106
      %p117 = scmp.eq.s32.totalorder %s31, 0
      %p118 = por %p116, %p117
      %p119 = scmp.ne.s32.totalorder %s105, %s106
      %p120 = scmp.eq.s32.totalorder %s32, 1
      %p121 = por %p119, %p120
      %p123 = scmp.ne.s32.totalorder %s106, %s122
      %p124 = scmp.eq.s32.totalorder %s32, 0
      %p125 = por %p123, %p124
      %s126 = ssub.s32 %s33, %s45
      %s127 = ssub.s32 %s34, %s41
      %s128 = sor.u32 %s126, %s127
      %p129 = scmp.eq.s32.totalorder %s128, 0
      %s131 = sadd.s32 %s130, 1
      %s132 = scalar_select %p129, %s130, %s131
      %p135 = pneg %p129
      %p136 = scmp.eq.s32.totalorder %s26, 1
      %p137 = por %p135, %p136
      %p138 = scmp.ne.s32.totalorder %s130, %s133
      %p139 = scmp.eq.s32.totalorder %s26, 0
      %p140 = por %p138, %p139
      %p141 = scmp.ne.s32.totalorder %s130, %s133
      %p142 = scmp.eq.s32.totalorder %s31, 1
      %p143 = por %p141, %p142
      %p144 = scmp.ne.s32.totalorder %s133, %s134
      %p145 = scmp.eq.s32.totalorder %s31, 0
      %p146 = por %p144, %p145
      %p147 = scmp.ne.s32.totalorder %s133, %s134
      %p148 = scmp.eq.s32.totalorder %s32, 1
      %p149 = por %p147, %p148
      %p151 = scmp.ne.s32.totalorder %s134, %s150
      %p152 = scmp.eq.s32.totalorder %s32, 0
      %p153 = por %p151, %p152
      %s155 = sadd.s32 %s154, 1
      %p158 = scmp.eq.s32.totalorder %s26, 1
      %p159 = scmp.ne.s32.totalorder %s154, %s156
      %p160 = scmp.eq.s32.totalorder %s26, 0
      %p161 = por %p159, %p160
      %p162 = scmp.ne.s32.totalorder %s154, %s156
      %p163 = scmp.eq.s32.totalorder %s31, 1
      %p164 = por %p162, %p163
      %p165 = scmp.ne.s32.totalorder %s156, %s157
      %p166 = scmp.eq.s32.totalorder %s31, 0
      %p167 = por %p165, %p166
      %p168 = scmp.ne.s32.totalorder %s156, %s157
      %p169 = scmp.eq.s32.totalorder %s32, 1
      %p170 = por %p168, %p169
      %p172 = scmp.ne.s32.totalorder %s157, %s171
      %p173 = scmp.eq.s32.totalorder %s32, 0
      %p174 = por %p172, %p173
      %s176 = sadd.s32 %s175, 1
      %p179 = scmp.eq.s32.totalorder %s26, 1
      %p180 = scmp.ne.s32.totalorder %s175, %s177
      %p181 = scmp.eq.s32.totalorder %s26, 0
      %p182 = por %p180, %p181
      %p183 = scmp.ne.s32.totalorder %s175, %s177
      %p184 = scmp.eq.s32.totalorder %s31, 1
      %p185 = por %p183, %p184
      %p186 = scmp.ne.s32.totalorder %s177, %s178
      %p187 = scmp.eq.s32.totalorder %s31, 0
      %p188 = por %p186, %p187
      %p189 = scmp.ne.s32.totalorder %s177, %s178
      %p190 = scmp.eq.s32.totalorder %s32, 1
      %p191 = por %p189, %p190
      %p193 = scmp.ne.s32.totalorder %s178, %s192
      %p194 = scmp.eq.s32.totalorder %s32, 0
      %p195 = por %p193, %p194
      %s196 = ssub.s32 %s33, %s45
      %s197 = ssub.s32 %s34, %s41
      %s198 = sor.u32 %s196, %s197
      %p199 = scmp.eq.s32.totalorder %s198, 0
      %s201 = sadd.s32 %s200, 1
      %s202 = scalar_select %p199, %s200, %s201
      %p205 = pneg %p199
      %p206 = scmp.eq.s32.totalorder %s26, 1
      %p207 = por %p205, %p206
      %p208 = scmp.ne.s32.totalorder %s200, %s203
      %p209 = scmp.eq.s32.totalorder %s26, 0
      %p210 = por %p208, %p209
      %p211 = scmp.ne.s32.totalorder %s200, %s203
      %p212 = scmp.eq.s32.totalorder %s31, 1
      %p213 = por %p211, %p212
      %p214 = scmp.ne.s32.totalorder %s203, %s204
      %p215 = scmp.eq.s32.totalorder %s31, 0
      %p216 = por %p214, %p215
      %p217 = scmp.ne.s32.totalorder %s203, %s204
      %p218 = scmp.eq.s32.totalorder %s32, 1
      %p219 = por %p217, %p218
      %p221 = scmp.ne.s32.totalorder %s204, %s220
      %p222 = scmp.eq.s32.totalorder %s32, 0
      %p223 = por %p221, %p222
      %s224 = ssub.s32 %s33, %s45
      %s225 = ssub.s32 %s34, %s41
      %s226 = sor.u32 %s224, %s225
      %p227 = scmp.eq.s32.totalorder %s226, 0
      %s229 = sadd.s32 %s228, 1
      %s230 = scalar_select %p227, %s228, %s229
      %p233 = pneg %p227
      %p234 = scmp.eq.s32.totalorder %s26, 1
      %p235 = por %p233, %p234
      %p236 = scmp.ne.s32.totalorder %s228, %s231
      %p237 = scmp.eq.s32.totalorder %s26, 0
      %p238 = por %p236, %p237
      %p239 = scmp.ne.s32.totalorder %s228, %s231
      %p240 = scmp.eq.s32.totalorder %s31, 1
      %p241 = por %p239, %p240
      %p242 = scmp.ne.s32.totalorder %s231, %s232
      %p243 = scmp.eq.s32.totalorder %s31, 0
      %p244 = por %p242, %p243
      %p245 = scmp.ne.s32.totalorder %s231, %s232
      %p246 = scmp.eq.s32.totalorder %s32, 1
      %p247 = por %p245, %p246
      %p249 = scmp.ne.s32.totalorder %s232, %s248
      %p250 = scmp.eq.s32.totalorder %s32, 0
      %p251 = por %p249, %p250
      %p252 = scmp.le.s32.totalorder 1, %s26
      %p253 = scmp.lt.s32.totalorder %s26, 3
      %p254 = pnand %p252, %p253
      %p255 = pneg %p254
      // Predicated region
      $region9: #{tpu_custom_call.1} parent=5 // pred_check
        _
      $region10: #{tpu_custom_call.1} parent=5 // pred_check_branch
        %257 = sbr.rel (%p254) target = $region12
      $region11: #{tpu_custom_call.1} parent=5 // pred_region
        %s258 = ssub.s32 %s26, 1
        // Predicated region
        $region13: #{tpu_custom_call.1} parent=11 // pred_check
          %p259 = pneg %p167
        $region14: #{tpu_custom_call.1} parent=11 // pred_check_branch
          %261 = sbr.rel (%p259) target = $region16
        $region15: #{tpu_custom_call.1} parent=11 // pred_region
          _
        $region16: #{tpu_custom_call.1} parent=11 // pred_fallthru
          _
        // Predicated region
        $region17: #{tpu_custom_call.1} parent=11 // pred_check
          %p262 = pneg %p188
        $region18: #{tpu_custom_call.1} parent=11 // pred_check_branch
          %264 = sbr.rel (%p262) target = $region20
        $region19: #{tpu_custom_call.1} parent=11 // pred_region
          _
        $region20: #{tpu_custom_call.1} parent=11 // pred_fallthru
          _
      $region12: #{tpu_custom_call.1} parent=5 // pred_fallthru
        _
      %p265 = scmp.lt.s32.totalorder %s26, 2
      // Predicated region
      $region21: #{tpu_custom_call.1} parent=5 // pred_check
        %p266 = pneg %p265
      $region22: #{tpu_custom_call.1} parent=5 // pred_check_branch
        %268 = sbr.rel (%p266) target = $region24
      $region23: #{tpu_custom_call.1} parent=5 // pred_region
        // Predicated region
        $region25: #{tpu_custom_call.1} parent=23 // pred_check
          %p269 = pneg %p60
        $region26: #{tpu_custom_call.1} parent=23 // pred_check_branch
          %271 = sbr.rel (%p269) target = $region28
        $region27: #{tpu_custom_call.1} parent=23 // pred_region
          %s272 = sand.u32 %s50, 1
          %s273 = scalar_lea.sflag [#allocation3], %s272
          %s274 = sand.u32 %s50, 1
          %s275 = smul.addr %s274, 8
          %s276 = scalar_lea.vmem [#allocation2], %s275
          %s278 = ssub.s32 128, 128
          %279 = vsyncadd %s273, %s278
          %s280 = sadd.s32 %s34, %s33
          %s281 = smul.addr %s280, 128
          %s282 = scalar_lea.hbm %s0, %s281
          %s284 = sshll.u32 %s276, 4
          %s285 = int_to_ptr.vmem [resolvable:$true] %s284
          %287 = dma.hbm_to_vmem [thread:$0]  %s282, 128, %s285, %s273
        $region28: #{tpu_custom_call.1} parent=23 // pred_fallthru
          _
        // Predicated region
        $region29: #{tpu_custom_call.1} parent=23 // pred_check
          %p288 = pneg %p86
        $region30: #{tpu_custom_call.1} parent=23 // pred_check_branch
          %290 = sbr.rel (%p288) target = $region32
        $region31: #{tpu_custom_call.1} parent=23 // pred_region
          %s291 = sand.u32 %s26, 1
          %s292 = scalar_lea.sflag [#allocation6], %s291
          %s293 = sand.u32 %s76, 1
          %s294 = smul.addr %s293, 8
          %s295 = scalar_lea.vmem [#allocation5], %s294
          %s297 = ssub.s32 128, 128
          %298 = vsyncadd %s292, %s297
          %s299 = smul.addr %s33, 128
          %s300 = scalar_lea.hbm %s1, %s299
          %s302 = sshll.u32 %s295, 4
          %s303 = int_to_ptr.vmem [resolvable:$true] %s302
          %305 = dma.hbm_to_vmem [thread:$0]  %s300, 128, %s303, %s292
        $region32: #{tpu_custom_call.1} parent=23 // pred_fallthru
          _
        // Predicated region
        $region33: #{tpu_custom_call.1} parent=23 // pred_check
          %p306 = pneg %p112
        $region34: #{tpu_custom_call.1} parent=23 // pred_check_branch
          %308 = sbr.rel (%p306) target = $region36
        $region35: #{tpu_custom_call.1} parent=23 // pred_region
          %s309 = sand.u32 %s26, 1
          %s310 = scalar_lea.sflag [#allocation6], %s309
          %s311 = sand.u32 %s102, 1
          %s312 = smul.addr %s311, 8
          %s313 = scalar_lea.vmem [#allocation7], %s312
          %s315 = ssub.s32 128, 128
          %316 = vsyncadd %s310, %s315
          %s317 = smul.addr %s33, 128
          %s318 = scalar_lea.hbm %s2, %s317
          %s320 = sshll.u32 %s313, 4
          %s321 = int_to_ptr.vmem [resolvable:$true] %s320
          %323 = dma.hbm_to_vmem [thread:$0]  %s318, 128, %s321, %s310
        $region36: #{tpu_custom_call.1} parent=23 // pred_fallthru
          _
        // Predicated region
        $region37: #{tpu_custom_call.1} parent=23 // pred_check
          %p324 = pneg %p140
        $region38: #{tpu_custom_call.1} parent=23 // pred_check_branch
          %326 = sbr.rel (%p324) target = $region40
        $region39: #{tpu_custom_call.1} parent=23 // pred_region
          %p327 = scmp.lt.s32.totalorder %s33, 1
          %s328 = scalar_select %p327, %s33, 1
          %p329 = scmp.lt.s32.totalorder %s34, 0
          %s330 = scalar_select %p329, %s34, 0
          %s331 = sadd.s32 %s330, %s328
          %s332 = smul.addr %s331, 2
          %s333 = scalar_lea.vmem %s3, %s332
        $region40: #{tpu_custom_call.1} parent=23 // pred_fallthru
          _
      $region24: #{tpu_custom_call.1} parent=5 // pred_fallthru
        _
      %p334 = scmp.le.s32.totalorder 1, %s26
      %p335 = scmp.lt.s32.totalorder %s26, 3
      %p336 = pnand %p334, %p335
      %p337 = pneg %p336
      // Predicated region
      $region41: #{tpu_custom_call.1} parent=5 // pred_check
        _
      $region42: #{tpu_custom_call.1} parent=5 // pred_check_branch
        %339 = sbr.rel (%p336) target = $region44
      $region43: #{tpu_custom_call.1} parent=5 // pred_region
        %s340 = ssub.s32 %s26, 1
        %s341 = sand.u32 %s53, 1
        %s342 = scalar_lea.sflag [#allocation3], %s341
        %s343 = sand.u32 %s53, 1
        %s344 = smul.addr %s343, 8
        %s345 = scalar_lea.vmem [#allocation2], %s344
        // Predicated region
        $region45: #{tpu_custom_call.1} parent=43 // pred_check
          %p346 = pneg %p66
        $region46: #{tpu_custom_call.1} parent=43 // pred_check_branch
          %348 = sbr.rel (%p346) target = $region48
        $region47: #{tpu_custom_call.1} parent=43 // pred_region
          %349 = dma.done %s342, 128
        $region48: #{tpu_custom_call.1} parent=43 // pred_fallthru
          _
        %s350 = sand.u32 %s31, 1
        %s351 = scalar_lea.sflag [#allocation6], %s350
        %s352 = sand.u32 %s79, 1
        %s353 = smul.addr %s352, 8
        %s354 = scalar_lea.vmem [#allocation5], %s353
        // Predicated region
        $region49: #{tpu_custom_call.1} parent=43 // pred_check
          %p355 = pneg %p92
        $region50: #{tpu_custom_call.1} parent=43 // pred_check_branch
          %357 = sbr.rel (%p355) target = $region52
        $region51: #{tpu_custom_call.1} parent=43 // pred_region
          %358 = dma.done %s351, 128
        $region52: #{tpu_custom_call.1} parent=43 // pred_fallthru
          _
        %s359 = sand.u32 %s31, 1
        %s360 = scalar_lea.sflag [#allocation6], %s359
        %s361 = sand.u32 %s105, 1
        %s362 = smul.addr %s361, 8
        %s363 = scalar_lea.vmem [#allocation7], %s362
        // Predicated region
        $region53: #{tpu_custom_call.1} parent=43 // pred_check
          %p364 = pneg %p118
        $region54: #{tpu_custom_call.1} parent=43 // pred_check_branch
          %366 = sbr.rel (%p364) target = $region56
        $region55: #{tpu_custom_call.1} parent=43 // pred_region
          %367 = dma.done %s360, 128
        $region56: #{tpu_custom_call.1} parent=43 // pred_fallthru
          _
        %s368 = sand.u32 %s53, 1
        %s369 = scalar_lea.sflag [#allocation3], %s368
        %s370 = sand.u32 %s53, 1
        %s371 = smul.addr %s370, 8
        %s372 = scalar_lea.vmem [#allocation2], %s371
        %p373 = pneg %p66
        %p374 = pneg %p63
        %s375 = sand.u32 %s31, 1
        %s376 = scalar_lea.sflag [#allocation6], %s375
        %s377 = sand.u32 %s79, 1
        %s378 = smul.addr %s377, 8
        %s379 = scalar_lea.vmem [#allocation5], %s378
        %p380 = pneg %p92
        %p381 = pneg %p89
        %s382 = sand.u32 %s31, 1
        %s383 = scalar_lea.sflag [#allocation6], %s382
        %s384 = sand.u32 %s105, 1
        %s385 = smul.addr %s384, 8
        %s386 = scalar_lea.vmem [#allocation7], %s385
        %p387 = pneg %p118
        %p388 = pneg %p115
        %p389 = scmp.lt.s32.totalorder %s35, 1
        %s390 = scalar_select %p389, %s35, 1
        %p391 = scmp.lt.s32.totalorder %s36, 0
        %s392 = scalar_select %p391, %s36, 0
        %s393 = sadd.s32 %s392, %s390
        %s394 = smul.addr %s393, 2
        %s395 = scalar_lea.vmem %s3, %s394
        %p396 = pneg %p146
        %p397 = pneg %p143
        %p398 = pneg %p167
        %p399 = pneg %p164
        %p400 = pneg %p188
        %p401 = pneg %p185
        %p402 = pneg %p216
        %p403 = pneg %p213
        %s404 = sand.u32 %s203, 1
        %s405 = scalar_lea.sflag [#allocation4], %s404
        %s406 = sand.u32 %s203, 1
        %s407 = smul.addr %s406, 8
        %s408 = scalar_lea.vmem [#allocation8], %s407
        %p409 = pneg %p244
        %p410 = pneg %p241
        %s411 = sand.u32 %s231, 1
        %s412 = scalar_lea.sflag [#allocation10], %s411
        %s413 = sand.u32 %s231, 1
        %s414 = smul.addr %s413, 8
        %s415 = scalar_lea.vmem [#allocation9], %s414
        %p416 = scmp.lt.s32.totalorder %s35, 1
        %s417 = scalar_select %p416, %s35, 1
        %p418 = scmp.lt.s32.totalorder %s36, 0
        %s419 = scalar_select %p418, %s36, 0
        %s420 = sadd.s32 %s419, %s417
        %s421 = smul.addr %s420, 2
        %s422 = scalar_lea.vmem %s3, %s421
        %s425 = smul.u32 %s36, 8
        %v426 = vld [vmem:[%s345] sm:$0xff]
        %v427 = vmul.f32 %v426, 0.17677669
        %v428 = vld [vmem:[%s354] sm:$0xff]
        %v429 = vld [vmem:[%s363] sm:$0xff]
        %vm430 = vcmask 261120
        %v432 = vsel %vm430, %v427, 0
        %v435 = vsel %vm430, %v428, 0
        %437 = vmatprep.subr.mxu0 0.0
        %438 = vmatpush1.xpose.msra.mxu0 %v435
        %439 = vmatprep.subr.mxu0 0.0
        %440 = vmatpush1.xpose.msra.mxu0 0.0
        %441 = vmatprep.subr.mxu0 0.0
        %442 = vmatpush1.xpose.msra.mxu0 0.0
        %443 = vmatprep.subr.mxu0 0.0
        %444 = vmatpush1.xpose.msra.mxu0 0.0
        %445 = vmatprep.subr.mxu0 0.0
        %446 = vmatpush1.xpose.msra.mxu0 0.0
        %447 = vmatprep.subr.mxu0 0.0
        %448 = vmatpush1.xpose.msra.mxu0 0.0
        %449 = vmatprep.subr.mxu0 0.0
        %450 = vmatpush1.xpose.msra.mxu0 0.0
        %451 = vmatprep.subr.mxu0 0.0
        %452 = vmatpush1.xpose.msra.mxu0 0.0
        %453 = vmatprep.subr.mxu0 0.0
        %454 = vmatpush1.xpose.msra.mxu0 0.0
        %455 = vmatprep.subr.mxu0 0.0
        %456 = vmatpush1.xpose.msra.mxu0 0.0
        %457 = vmatprep.subr.mxu0 0.0
        %458 = vmatpush1.xpose.msra.mxu0 0.0
        %459 = vmatprep.subr.mxu0 0.0
        %460 = vmatpush1.xpose.msra.mxu0 0.0
        %461 = vmatprep.subr.mxu0 0.0
        %462 = vmatpush1.xpose.msra.mxu0 0.0
        %463 = vmatprep.subr.mxu0 0.0
        %464 = vmatpush1.xpose.msra.mxu0 0.0
        %465 = vmatprep.subr.mxu0 0.0
        %466 = vmatpush1.xpose.msra.mxu0 0.0
        %467 = vmatprep.subr.mxu0 0.0
        %468 = vmatpush1.xpose.msra.mxu0 0.0
        %469 = vmatprep.subr.mxu0 0.0
        %470 = vmatpush1.xpose.msra.mxu0 0.0
        %471 = vmatprep.subr.mxu0 0.0
        %472 = vmatpush1.xpose.msra.mxu0 0.0
        %473 = vmatprep.subr.mxu0 0.0
        %474 = vmatpush1.xpose.msra.mxu0 0.0
        %475 = vmatprep.subr.mxu0 0.0
        %476 = vmatpush1.xpose.msra.mxu0 0.0
        %477 = vmatprep.subr.mxu0 0.0
        %478 = vmatpush1.xpose.msra.mxu0 0.0
        %479 = vmatprep.subr.mxu0 0.0
        %480 = vmatpush1.xpose.msra.mxu0 0.0
        %481 = vmatprep.subr.mxu0 0.0
        %482 = vmatpush1.xpose.msra.mxu0 0.0
        %483 = vmatprep.subr.mxu0 0.0
        %484 = vmatpush1.xpose.msra.mxu0 0.0
        %485 = vmatprep.subr.mxu0 0.0
        %486 = vmatpush1.xpose.msra.mxu0 0.0
        %487 = vmatprep.subr.mxu0 0.0
        %488 = vmatpush1.xpose.msra.mxu0 0.0
        %489 = vmatprep.subr.mxu0 0.0
        %490 = vmatpush1.xpose.msra.mxu0 0.0
        %491 = vmatprep.subr.mxu0 0.0
        %492 = vmatpush1.xpose.msra.mxu0 0.0
        %493 = vmatprep.subr.mxu0 0.0
        %494 = vmatpush1.xpose.msra.mxu0 0.0
        %495 = vmatprep.subr.mxu0 0.0
        %496 = vmatpush1.xpose.msra.mxu0 0.0
        %497 = vmatprep.subr.mxu0 0.0
        %498 = vmatpush1.xpose.msra.mxu0 0.0
        %499 = vmatprep.subr.mxu0 0.0
        %500 = vmatpush1.xpose.msra.mxu0 0.0
        %501 = vmatprep.mubr.f32.mxu0 0.0
        %502 = vmatmul.mubr.f32.gmra.mrb[0].mxu0 %v432
        %v503 = vpop.f32.mrb[0].mxu0
        %v504 = vadd.f32 0.0, %v503
        %v505 = vpop.f32.mrb[0].mxu0
        %506 = vdwg.mxu0
        %v507 = vld [vmem:[%s422] sm:$0x3]
        %vm508 = vnez %v507
        %v509 = vsel %vm508, 16843009, 0
        %v510 = vunpack.c.0.s8 %v509
        %vm511 = vcmp.ne.s32.totalorder %v510, 0
        %v512 = vsel %vm511, -1e+30, %v504
        %vm513 = vcmask 64512
        %v514 = vsel %vm513, %v512, -inf
        %515 = vmax.xlane.f32.xlu0 %v514
        %v516 = vpop.xlane.xlu0 %515
        %v517 = vsub.f32 %v512, %v516
        %v518 = vmul.f32 %v517, 1.442695
        %v519 = vpow.pop %v518
        %v520 = vsel %vm513, %v519, 0.0
        %521 = vadd.xlane.f32.xlu0 %v520
        %v522 = vpop.xlane.xlu0 %521
        %v523 = vrcp.pop %v522
        %v524 = vmul.f32 %v519, %v523
        %525 = vst.msk [vmem:[%s415] sm:$0xff] %vm513, %v524
        %s526 = scalar_lea.vmem %s363, %s425 [#allocation7]
        %v527 = vld [vmem:[%s526] sm:$0xff]
        %v529 = vsel %vm513, %v524, 0
        %531 = vmatprep.subr.mxu0 0.0
        %532 = vmatpush1.msra.mxu0 %v429
        %533 = vmatprep.subr.mxu0 0.0
        %534 = vmatpush1.msra.mxu0 0.0
        %535 = vmatprep.subr.mxu0 0.0
        %536 = vmatpush1.msra.mxu0 0.0
        %537 = vmatprep.subr.mxu0 0.0
        %538 = vmatpush1.msra.mxu0 0.0
        %539 = vmatprep.subr.mxu0 0.0
        %540 = vmatpush1.msra.mxu0 0.0
        %541 = vmatprep.subr.mxu0 0.0
        %542 = vmatpush1.msra.mxu0 0.0
        %543 = vmatprep.subr.mxu0 0.0
        %544 = vmatpush1.msra.mxu0 0.0
        %545 = vmatprep.subr.mxu0 0.0
        %546 = vmatpush1.msra.mxu0 0.0
        %547 = vmatprep.subr.mxu0 0.0
        %548 = vmatpush1.msra.mxu0 0.0
        %549 = vmatprep.subr.mxu0 0.0
        %550 = vmatpush1.msra.mxu0 0.0
        %551 = vmatprep.subr.mxu0 0.0
        %552 = vmatpush1.msra.mxu0 0.0
        %553 = vmatprep.subr.mxu0 0.0
        %554 = vmatpush1.msra.mxu0 0.0
        %555 = vmatprep.subr.mxu0 0.0
        %556 = vmatpush1.msra.mxu0 0.0
        %557 = vmatprep.subr.mxu0 0.0
        %558 = vmatpush1.msra.mxu0 0.0
        %559 = vmatprep.subr.mxu0 0.0
        %560 = vmatpush1.msra.mxu0 0.0
        %561 = vmatprep.subr.mxu0 0.0
        %562 = vmatpush1.msra.mxu0 0.0
        %563 = vmatprep.subr.mxu0 0.0
        %564 = vmatpush1.msra.mxu0 0.0
        %565 = vmatprep.subr.mxu0 0.0
        %566 = vmatpush1.msra.mxu0 0.0
        %567 = vmatprep.subr.mxu0 0.0
        %568 = vmatpush1.msra.mxu0 0.0
        %569 = vmatprep.subr.mxu0 0.0
        %570 = vmatpush1.msra.mxu0 0.0
        %571 = vmatprep.subr.mxu0 0.0
        %572 = vmatpush1.msra.mxu0 0.0
        %573 = vmatprep.subr.mxu0 0.0
        %574 = vmatpush1.msra.mxu0 0.0
        %575 = vmatprep.subr.mxu0 0.0
        %576 = vmatpush1.msra.mxu0 0.0
        %577 = vmatprep.subr.mxu0 0.0
        %578 = vmatpush1.msra.mxu0 0.0
        %579 = vmatprep.subr.mxu0 0.0
        %580 = vmatpush1.msra.mxu0 0.0
        %581 = vmatprep.subr.mxu0 0.0
        %582 = vmatpush1.msra.mxu0 0.0
        %583 = vmatprep.subr.mxu0 0.0
        %584 = vmatpush1.msra.mxu0 0.0
        %585 = vmatprep.subr.mxu0 0.0
        %586 = vmatpush1.msra.mxu0 0.0
        %587 = vmatprep.subr.mxu0 0.0
        %588 = vmatpush1.msra.mxu0 0.0
        %589 = vmatprep.subr.mxu0 0.0
        %590 = vmatpush1.msra.mxu0 0.0
        %591 = vmatprep.subr.mxu0 0.0
        %592 = vmatpush1.msra.mxu0 0.0
        %593 = vmatprep.subr.mxu0 0.0
        %594 = vmatpush1.msra.mxu0 0.0
        %595 = vmatprep.mubr.f32.mxu0 0.0
        %596 = vmatmul.mubr.f32.gmra.mrb[0].mxu0 %v529
        %v597 = vpop.f32.mrb[0].mxu0
        %v598 = vadd.f32 %v527, %v597
        %v599 = vpop.f32.mrb[0].mxu0
        %600 = vdwg.mxu0
        %v601 = vsel %vm430, %v598, 0.0
        %602 = vadd.xlane.f32.xlu0 %v601
        %v603 = vpop.xlane.xlu0 %602
        %v604 = vrcp.pop 32.0
        %v605 = vmul.f32 %v603, %v604
        %v606 = vsub.f32 %v598, %v605
        %v607 = vmul.f32 %v606, %v606
        %v608 = vsel %vm430, %v607, 0.0
        %609 = vadd.xlane.f32.xlu0 %v608
        %v610 = vpop.xlane.xlu0 %609
        %v611 = vmul.f32 %v610, %v604
        %v612 = vadd.f32 %v611, 1e-05
        %v613 = vrsqrt.pop %v612
        %v614 = vmul.f32 %v606, %v613
        %v615 = vld [vmem:[%s4] sm:$0x1]
        %v617 = vlaneseq
        %v618 = vshrl.u32 %v617, 7
        %v619 = vsub.s32 0, %v618
        %v620 = vrot.slane %v615, %v619
        %v622 = vmul.f32 %v614, %v620
        %v623 = vld [vmem:[%s5] sm:$0x1]
        %v625 = vlaneseq
        %v626 = vshrl.u32 %v625, 7
        %v627 = vsub.s32 0, %v626
        %v628 = vrot.slane %v623, %v627
        %v630 = vadd.f32 %v622, %v628
        %631 = vst.msk [vmem:[%s408] sm:$0xff] %vm430, %v630
        %s632 = sand.u32 %s203, 1
        %s633 = scalar_lea.sflag [#allocation4], %s632
        %s634 = sand.u32 %s203, 1
        %s635 = smul.addr %s634, 8
        %s636 = scalar_lea.vmem [#allocation8], %s635
        %s637 = sand.u32 %s231, 1
        %s638 = scalar_lea.sflag [#allocation10], %s637
        %s639 = sand.u32 %s231, 1
        %s640 = smul.addr %s639, 8
        %s641 = scalar_lea.vmem [#allocation9], %s640
        // Predicated region
        $region57: #{tpu_custom_call.1} parent=43 // pred_check
          %p642 = pneg %p213
        $region58: #{tpu_custom_call.1} parent=43 // pred_check_branch
          %644 = sbr.rel (%p642) target = $region60
        $region59: #{tpu_custom_call.1} parent=43 // pred_region
          %s646 = ssub.s32 128, 128
          %647 = vsyncadd %s633, %s646
          %s648 = sadd.s32 %s36, %s35
          %s649 = smul.addr %s648, 128
          %s650 = scalar_lea.hbm %s6, %s649
          %s652 = sshll.u32 %s636, 4
          %s653 = int_to_ptr.vmem [resolvable:$true] %s652
          %655 = dma.vmem_to_hbm [thread:$0]  %s653, 128, %s650, %s633
        $region60: #{tpu_custom_call.1} parent=43 // pred_fallthru
          _
        // Predicated region
        $region61: #{tpu_custom_call.1} parent=43 // pred_check
          %p656 = pneg %p241
        $region62: #{tpu_custom_call.1} parent=43 // pred_check_branch
          %658 = sbr.rel (%p656) target = $region64
        $region63: #{tpu_custom_call.1} parent=43 // pred_region
          %s660 = ssub.s32 128, 128
          %661 = vsyncadd %s638, %s660
          %s662 = sadd.s32 %s36, %s35
          %s663 = smul.addr %s662, 128
          %s664 = scalar_lea.hbm %s7, %s663
          %s666 = sshll.u32 %s641, 4
          %s667 = int_to_ptr.vmem [resolvable:$true] %s666
          %669 = dma.vmem_to_hbm [thread:$0]  %s667, 128, %s664, %s638
        $region64: #{tpu_custom_call.1} parent=43 // pred_fallthru
          _
      $region44: #{tpu_custom_call.1} parent=5 // pred_fallthru
        _
      %p670 = scmp.le.s32.totalorder 2, %s26
      // Predicated region
      $region65: #{tpu_custom_call.1} parent=5 // pred_check
        %p671 = pneg %p670
      $region66: #{tpu_custom_call.1} parent=5 // pred_check_branch
        %673 = sbr.rel (%p671) target = $region68
      $region67: #{tpu_custom_call.1} parent=5 // pred_region
        %s674 = ssub.s32 %s26, 2
        // Predicated region
        $region69: #{tpu_custom_call.1} parent=67 // pred_check
          %p675 = pneg %p219
        $region70: #{tpu_custom_call.1} parent=67 // pred_check_branch
          %677 = sbr.rel (%p675) target = $region72
        $region71: #{tpu_custom_call.1} parent=67 // pred_region
          %s678 = sand.u32 %s204, 1
          %s679 = scalar_lea.sflag [#allocation4], %s678
          %s680 = sand.u32 %s204, 1
          %s681 = smul.addr %s680, 8
          %s682 = scalar_lea.vmem [#allocation8], %s681
          %683 = dma.done %s679, 128
        $region72: #{tpu_custom_call.1} parent=67 // pred_fallthru
          _
        // Predicated region
        $region73: #{tpu_custom_call.1} parent=67 // pred_check
          %p684 = pneg %p247
        $region74: #{tpu_custom_call.1} parent=67 // pred_check_branch
          %686 = sbr.rel (%p684) target = $region76
        $region75: #{tpu_custom_call.1} parent=67 // pred_region
          %s687 = sand.u32 %s232, 1
          %s688 = scalar_lea.sflag [#allocation10], %s687
          %s689 = sand.u32 %s232, 1
          %s690 = smul.addr %s689, 8
          %s691 = scalar_lea.vmem [#allocation9], %s690
          %692 = dma.done %s688, 128
        $region76: #{tpu_custom_call.1} parent=67 // pred_fallthru
          _
      $region68: #{tpu_custom_call.1} parent=5 // pred_fallthru
        _
    $region6: #{tpu_custom_call.1} parent=1 // loop_footer
      %s30 = sadd.s32 1, %s26
    $region7: #{tpu_custom_call.1} parent=1 // loop_footer_branch
      %25 = sbr.rel target = $region3
    $region8: #{tpu_custom_call.1} parent=1 // loop_exit
      _
    %693 = vsyncpa [#allocation3], 1
    %s694 = scalar_lea.sflag [#allocation3], 1
    %695 = vsyncpa %s694, 1
    %696 = vsyncpa [#allocation6], 1
    %s697 = scalar_lea.sflag [#allocation6], 1
    %698 = vsyncpa %s697, 1
    %699 = vsyncpa [#allocation4], 1
    %s700 = scalar_lea.sflag [#allocation4], 1
    %701 = vsyncpa %s700, 1
    %702 = vsyncpa [#allocation10], 1
    %s703 = scalar_lea.sflag [#allocation10], 1
    %704 = vsyncpa %s703, 1

</llo_original>
